<compile_context>
chip_gen: v5e
topology: v5e:2x2
jax: 0.10.0
libtpu: 0.0.40
codegen_flags: <defaults>
</compile_context>

<pallas_src>
import functools

import jax
import jax.numpy as jnp
from jax.experimental import pallas as pl
from jax.experimental.pallas import tpu as pltpu


def make_divisible(v, divisor=8, min_val=None):
    if min_val is None:
        min_val = divisor
    new_v = max(min_val, int(v + divisor / 2) // divisor * divisor)
    if new_v < 0.9 * v:
        new_v += divisor
    return new_v


def _round_up(v, m):
    return (v + m - 1) // m * m


def _vmem_capacity_bytes():
    """Per-core VMEM capacity (bytes) and whether we could query it."""
    try:
        info = pltpu.get_tpu_info()
        cap = int(getattr(info, "vmem_capacity_bytes", 0))
        if cap > 0:
            return cap, True
    except Exception:
        pass
    return 64 << 20, False   # conservative fallback (v7x-sized)


# ----------------------------------------------------------------------------
# Fused kernel: one grid step == an (nb, C, S) block of whole samples.
# ----------------------------------------------------------------------------
def _se_fused_kernel(x_ref, w1t_ref, b1_ref, w2_ref, b2_ref, o_ref, *, inv_s):
    # x_ref : (nb, C, S)  w1t_ref: (C, M)  b1_ref: (1, M)
    # w2_ref: (C, M)      b2_ref : (C, 1)  o_ref : (nb, C, S)
    x = x_ref[...]
    # AdaptiveAvgPool3d(1): accumulate in f32, divide by the true S.
    pooled = jnp.sum(x.astype(jnp.float32), axis=2, keepdims=True) * inv_s     # (nb,C,1)
    # fc.reduce (1x1x1 conv) + ReLU on the VPU: broadcast-mul + reduce over C.
    mid = jnp.sum(w1t_ref[...][None, :, :] * pooled, axis=1, keepdims=True) \
        + b1_ref[...][None, :, :]                                               # (nb,1,M)
    mid = jnp.maximum(mid, 0.0)
    # fc.expand + Hsigmoid: relu6(y + 3) / 6, lane reduce back to channels.
    y = jnp.sum(w2_ref[...][None, :, :] * mid, axis=2, keepdims=True) \
        + b2_ref[...][None, :, :]                                               # (nb,C,1)
    y = jnp.clip(y + 3.0, 0.0, 6.0) * (1.0 / 6.0)
    # Rescale in the native dtype (no full-slab f32 cast on the store path).
    o_ref[...] = x * y.astype(o_ref.dtype)


# ----------------------------------------------------------------------------
# Tiled pass 1: pool over S-tiles (ragged last tile masked), then FC +
# Hsigmoid into the (N, C, 1) scale.  Output block is resident across the
# (arbitrary) S axis and used as the accumulator.
# ----------------------------------------------------------------------------
def _se_pool_fc_kernel(x_ref, w1t_ref, b1_ref, w2_ref, b2_ref, scale_ref, *,
                       inv_s, true_s, tile_s, need_mask):
    s = pl.program_id(1)

    @pl.when(s == 0)
    def _():
        scale_ref[...] = jnp.zeros_like(scale_ref)

    x = x_ref[0].astype(jnp.float32)                                  # (C, tS)
    if need_mask:
        # Ragged last tile: zero out lanes past the true spatial extent.
        lane = jax.lax.broadcasted_iota(jnp.int32, x.shape, 1)
        x = jnp.where(lane < (true_s - s * tile_s), x, 0.0)
    scale_ref[0] = scale_ref[0] + jnp.sum(x, axis=1, keepdims=True)   # (C, 1)

    @pl.when(s == pl.num_programs(1) - 1)
    def _():
        pooled = scale_ref[0] * inv_s                                 # (C, 1)
        mid = jnp.sum(w1t_ref[...] * pooled, axis=0, keepdims=True) + b1_ref[...]
        mid = jnp.maximum(mid, 0.0)                                   # (1, M)
        y = jnp.sum(w2_ref[...] * mid, axis=1, keepdims=True) + b2_ref[...]  # (C,1)
        scale_ref[0] = jnp.clip(y + 3.0, 0.0, 6.0) * (1.0 / 6.0)


# ----------------------------------------------------------------------------
# Tiled pass 2: lane-dense elementwise rescale.
# ----------------------------------------------------------------------------
def _se_rescale_kernel(x_ref, scale_ref, o_ref):
    o_ref[0] = x_ref[0] * scale_ref[0].astype(o_ref.dtype)


def se_module_forward(x, w1, b1, w2, b2, *, force_tiled=False, tile_s=None,
                      max_block_n=None, in_place=False):
    """x: (N, C, D, H, W); w1: (M, C); b1: (M,); w2: (C, M); b2: (C,)."""
    N, C, D, H, W = x.shape
    S = D * H * W
    M = w1.shape[0]
    itemsize = jnp.dtype(x.dtype).itemsize

    # Lane-friendly weight/bias layouts; the tiny FC runs in f32.
    w1t = jnp.asarray(w1, jnp.float32).T              # (C, M)
    b1r = jnp.asarray(b1, jnp.float32).reshape(1, M)  # (1, M)
    w2f = jnp.asarray(w2, jnp.float32)                # (C, M)
    b2c = jnp.asarray(b2, jnp.float32).reshape(C, 1)  # (C, 1)
    inv_s = 1.0 / float(S)

    x_flat = x.reshape(N, C, S)
    weight_bytes = (2 * C * M + M + C) * 4

    # Generation-aware VMEM budgets (128 MiB on v5e/v6e, 64 MiB on v7x).
    vmem_cap, vmem_known = _vmem_capacity_bytes()
    fused_budget = max(vmem_cap - (20 << 20), 16 << 20)
    vmem_cap_limit = max(vmem_cap - (12 << 20), 16 << 20)

    per_sample_bytes = C * S * itemsize
    per_sample_f32 = C * S * 4 if itemsize < 4 else 0   # widened f32 pool temp
    # 2x double-buffered input + output slabs + f32 pooling temp.
    per_sample_cost = 4 * per_sample_bytes + per_sample_f32

    nb_budget = (fused_budget - weight_bytes) // max(per_sample_cost, 1)
    use_fused = (not force_tiled) and nb_budget >= 1

    # v7x hint: 64 MiB-VMEM chips have 2 TensorCores; with a single big sample
    # the fused grid=(1,) cannot use both, so prefer the (N, nS) tiled grids.
    if (vmem_known and vmem_cap <= (96 << 20) and N == 1
            and per_sample_bytes >= (16 << 20)):
        use_fused = False

    alias_kwargs = {"input_output_aliases": {0: 0}} if in_place else {}

    if use_fused:
        # Block several small samples per grid step so each DMA is >= ~2 MiB.
        nb = 1
        if per_sample_bytes < (2 << 20):
            nb = pl.cdiv(2 << 20, max(per_sample_bytes, 1))
        nb = int(max(1, min(nb, nb_budget, N)))
        if max_block_n is not None:
            nb = max(1, min(nb, int(max_block_n)))
        nN = pl.cdiv(N, nb)

        needed = weight_bytes + nb * per_sample_cost + (2 << 20)
        vmem_limit = int(min(max(needed, 16 << 20), vmem_cap_limit))

        out_flat = pl.pallas_call(
            functools.partial(_se_fused_kernel, inv_s=inv_s),
            out_shape=jax.ShapeDtypeStruct((N, C, S), x.dtype),
            grid_spec=pltpu.PrefetchScalarGridSpec(
                num_scalar_prefetch=0,
                grid=(nN,),
                in_specs=[
                    pl.BlockSpec((nb, C, S), lambda n: (n, 0, 0)),
                    pl.BlockSpec((C, M), lambda n: (0, 0)),
                    pl.BlockSpec((1, M), lambda n: (0, 0)),
                    pl.BlockSpec((C, M), lambda n: (0, 0)),
                    pl.BlockSpec((C, 1), lambda n: (0, 0)),
                ],
                out_specs=pl.BlockSpec((nb, C, S), lambda n: (n, 0, 0)),
            ),
            compiler_params=pltpu.CompilerParams(
                dimension_semantics=("parallel",),
                vmem_limit_bytes=vmem_limit),
            cost_estimate=pl.CostEstimate(
                flops=2 * N * C * S,
                transcendentals=0,
                bytes_accessed=2 * N * C * S * itemsize),
            **alias_kwargs,
        )(x_flat, w1t, b1r, w2f, b2c)
        return out_flat.reshape(N, C, D, H, W)

    # ---------------- tiled two-pass fallback (no host-side padding) --------
    s_ceil = _round_up(S, 128)
    target_tile = 4 << 20            # MiB-scale blocks reach ~85%+ of HBM roofline
    safety = max(vmem_cap - (24 << 20), 8 << 20)

    if tile_s is not None:
        tile_s1 = tile_s2 = max(128, (int(tile_s) // 128) * 128)
    else:
        base = (max(target_tile // (C * itemsize), 128) // 128) * 128
        # Pass 1: double-buffered input + tile-sized f32 temp; tiny (C,1) out.
        bpl1 = C * (2 * itemsize + (4 if itemsize < 4 else 0))
        tile_s1 = min(base, max((safety // bpl1) // 128 * 128, 128))
        # Pass 2: double-buffered input + output.
        bpl2 = C * 4 * itemsize
        tile_s2 = min(base, max((safety // bpl2) // 128 * 128, 128))
    tile_s1 = int(max(128, min(tile_s1, s_ceil)))
    tile_s2 = int(max(128, min(tile_s2, s_ceil)))
    nS1 = pl.cdiv(S, tile_s1)
    nS2 = pl.cdiv(S, tile_s2)

    vmem1 = int(min(max(C * tile_s1 * (2 * itemsize + 4) + weight_bytes + (2 << 20),
                        16 << 20), vmem_cap_limit))
    vmem2 = int(min(max(4 * C * tile_s2 * itemsize + (2 << 20), 16 << 20),
                    vmem_cap_limit))

    # Pass 1: pooled sums accumulated in the resident output block (ragged
    # last tile masked), FC applied at the last S step -> (N, C, 1) scale.
    scale = pl.pallas_call(
        functools.partial(_se_pool_fc_kernel, inv_s=inv_s, true_s=S,
                          tile_s=tile_s1, need_mask=(S % tile_s1 != 0)),
        out_shape=jax.ShapeDtypeStruct((N, C, 1), jnp.float32),
        grid_spec=pltpu.PrefetchScalarGridSpec(
            num_scalar_prefetch=0,
            grid=(N, nS1),
            in_specs=[
                pl.BlockSpec((1, C, tile_s1), lambda n, s: (n, 0, s)),
                pl.BlockSpec((C, M), lambda n, s: (0, 0)),
                pl.BlockSpec((1, M), lambda n, s: (0, 0)),
                pl.BlockSpec((C, M), lambda n, s: (0, 0)),
                pl.BlockSpec((C, 1), lambda n, s: (0, 0)),
            ],
            out_specs=pl.BlockSpec((1, C, 1), lambda n, s: (n, 0, 0)),
        ),
        compiler_params=pltpu.CompilerParams(
            dimension_semantics=("parallel", "arbitrary"),
            vmem_limit_bytes=vmem1),
        cost_estimate=pl.CostEstimate(
            flops=N * C * S,
            transcendentals=0,
            bytes_accessed=N * C * S * itemsize),
    )(x_flat, w1t, b1r, w2f, b2c)

    # Pass 2: lane-dense rescale; both grid axes parallel (v7x megacore).
    # Ragged last S-tile: out-of-bounds lanes are simply not written back.
    out_flat = pl.pallas_call(
        _se_rescale_kernel,
        out_shape=jax.ShapeDtypeStruct((N, C, S), x.dtype),
        grid_spec=pltpu.PrefetchScalarGridSpec(
            num_scalar_prefetch=0,
            grid=(N, nS2),
            in_specs=[
                pl.BlockSpec((1, C, tile_s2), lambda n, s: (n, 0, s)),
                pl.BlockSpec((1, C, 1), lambda n, s: (n, 0, 0)),
            ],
            out_specs=pl.BlockSpec((1, C, tile_s2), lambda n, s: (n, 0, s)),
        ),
        compiler_params=pltpu.CompilerParams(
            dimension_semantics=("parallel", "parallel"),
            vmem_limit_bytes=vmem2),
        cost_estimate=pl.CostEstimate(
            flops=N * C * S,
            transcendentals=0,
            bytes_accessed=2 * N * C * S * itemsize),
        **alias_kwargs,
    )(x_flat, scale)
    return out_flat.reshape(N, C, D, H, W)


def se_reference(x, w1, b1, w2, b2):
    """Pure-JAX reference of the PyTorch SEModule forward."""
    pooled = jnp.mean(x.astype(jnp.float32), axis=(2, 3, 4))        # (N, C)
    mid = jnp.maximum(pooled @ w1.astype(jnp.float32).T + b1, 0.0)  # (N, M)
    y = mid @ w2.astype(jnp.float32).T + b2                         # (N, C)
    y = jnp.clip(y + 3.0, 0.0, 6.0) / 6.0
    return (x * y[:, :, None, None, None].astype(x.dtype)).astype(x.dtype)


if __name__ == "__main__":
    key = jax.random.PRNGKey(0)

    def make_case(k, N, C, D, H, W, reduction=4):
        M = make_divisible(C // reduction)
        kx, kw1, kb1, kw2, kb2 = jax.random.split(k, 5)
        x = jax.random.normal(kx, (N, C, D, H, W), dtype=jnp.float32)
        # Conv3d(C, M, 1) -> (M, C); Conv3d(M, C, 1) -> (C, M)
        w1 = jax.random.normal(kw1, (M, C), dtype=jnp.float32) * 0.1
        b1 = jax.random.normal(kb1, (M,), dtype=jnp.float32) * 0.1
        w2 = jax.random.normal(kw2, (C, M), dtype=jnp.float32) * 0.1
        b2 = jax.random.normal(kb2, (C,), dtype=jnp.float32) * 0.1
        return x, w1, b1, w2, b2

    k1, k2 = jax.random.split(key)

    # Case 1: S = 256 (lane aligned) -> fused path, multi-sample block.
    args1 = make_case(k1, N=2, C=4, D=4, H=8, W=8)
    ref1 = se_reference(*args1)
    out1 = jax.block_until_ready(se_module_forward(*args1))
    assert out1.shape == args1[0].shape
    assert jnp.allclose(out1, ref1, atol=1e-5, rtol=1e-5)

    # Tiled fallback on the same inputs (multi-tile S, no masking needed).
    out1t = jax.block_until_ready(
        se_module_forward(*args1, force_tiled=True, tile_s=128))
    assert jnp.allclose(out1t, ref1, atol=1e-5, rtol=1e-5)

    # Case 2: S = 105 (NOT a multiple of 128) and N = 3 with a 2-sample block
    # -> fused path with full-extent (unpadded) lane blocks and a ragged
    # leading sample block.
    args2 = make_case(k2, N=3, C=8, D=3, H=5, W=7)
    ref2 = se_reference(*args2)
    out2 = jax.block_until_ready(se_module_forward(*args2, max_block_n=2))
    assert out2.shape == args2[0].shape
    assert jnp.allclose(out2, ref2, atol=1e-5, rtol=1e-5)

    # Tiled fallback with a ragged (iota-masked) last S-tile.
    out2t = jax.block_until_ready(
        se_module_forward(*args2, force_tiled=True, tile_s=128))
    assert jnp.allclose(out2t, ref2, atol=1e-5, rtol=1e-5)

    print("KERNEL_OK")
</pallas_src>

<mosaic_0001>
module attributes {stable_mosaic.version = 11 : i64} {
  func.func @_se_fused_kernel(%arg0: i32, %arg1: memref<2x4x256xf32, #tpu.memory_space<vmem>>, %arg2: memref<4x8xf32, #tpu.memory_space<vmem>>, %arg3: memref<1x8xf32, #tpu.memory_space<vmem>>, %arg4: memref<4x8xf32, #tpu.memory_space<vmem>>, %arg5: memref<4x1xf32, #tpu.memory_space<vmem>>, %arg6: memref<2x4x256xf32, #tpu.memory_space<vmem>>) attributes {dimension_semantics = [#tpu.dimension_semantics<parallel>], iteration_bounds = array<i64: 1>, scalar_prefetch = 0 : i64, scratch_operands = 0 : i64, tpu.core_type = #tpu.core_type<tc>, window_params = [{transform_indices = @transform_0, window_bounds = array<i64: 2, 4, 256>}, {pipeline_mode = #tpu.pipeline_mode<synchronous>, transform_indices = @transform_1, window_bounds = array<i64: 4, 8>}, {pipeline_mode = #tpu.pipeline_mode<synchronous>, transform_indices = @transform_2, window_bounds = array<i64: 1, 8>}, {pipeline_mode = #tpu.pipeline_mode<synchronous>, transform_indices = @transform_3, window_bounds = array<i64: 4, 8>}, {pipeline_mode = #tpu.pipeline_mode<synchronous>, transform_indices = @transform_4, window_bounds = array<i64: 4, 1>}, {transform_indices = @transform_5, window_bounds = array<i64: 2, 4, 256>}]} {
    %c0 = arith.constant 0 : index
    %c0_0 = arith.constant 0 : index
    %c0_1 = arith.constant 0 : index
    %0 = vector.load %arg1[%c0, %c0_0, %c0_1] : memref<2x4x256xf32, #tpu.memory_space<vmem>>, vector<2x4x256xf32>
    %cst = arith.constant dense<0.000000e+00> : vector<2x4xf32>
    %1 = vector.multi_reduction <add>, %0, %cst [2] : vector<2x4x256xf32> to vector<2x4xf32>
    %2 = vector.shape_cast %1 : vector<2x4xf32> to vector<2x4x1xf32>
    %cst_2 = arith.constant 3.906250e-03 : f32
    %3 = vector.broadcast %cst_2 : f32 to vector<2x4x1xf32>
    %4 = arith.mulf %2, %3 : vector<2x4x1xf32>
    %c0_3 = arith.constant 0 : index
    %c0_4 = arith.constant 0 : index
    %5 = vector.load %arg2[%c0_3, %c0_4] : memref<4x8xf32, #tpu.memory_space<vmem>>, vector<4x8xf32>
    %6 = vector.shape_cast %5 : vector<4x8xf32> to vector<1x4x8xf32>
    %7 = vector.broadcast %6 : vector<1x4x8xf32> to vector<2x4x8xf32>
    %8 = vector.broadcast %4 : vector<2x4x1xf32> to vector<2x4x8xf32>
    %9 = arith.mulf %7, %8 : vector<2x4x8xf32>
    %cst_5 = arith.constant dense<0.000000e+00> : vector<2x8xf32>
    %10 = vector.multi_reduction <add>, %9, %cst_5 [1] : vector<2x4x8xf32> to vector<2x8xf32>
    %11 = vector.shape_cast %10 : vector<2x8xf32> to vector<2x1x8xf32>
    %c0_6 = arith.constant 0 : index
    %c0_7 = arith.constant 0 : index
    %12 = vector.load %arg3[%c0_6, %c0_7] : memref<1x8xf32, #tpu.memory_space<vmem>>, vector<1x8xf32>
    %13 = vector.shape_cast %12 : vector<1x8xf32> to vector<1x1x8xf32>
    %14 = vector.broadcast %13 : vector<1x1x8xf32> to vector<2x1x8xf32>
    %15 = arith.addf %11, %14 : vector<2x1x8xf32>
    %cst_8 = arith.constant 0.000000e+00 : f32
    %16 = vector.broadcast %cst_8 : f32 to vector<2x1x8xf32>
    %17 = arith.maximumf %15, %16 : vector<2x1x8xf32>
    %c0_9 = arith.constant 0 : index
    %c0_10 = arith.constant 0 : index
    %18 = vector.load %arg4[%c0_9, %c0_10] : memref<4x8xf32, #tpu.memory_space<vmem>>, vector<4x8xf32>
    %19 = vector.shape_cast %18 : vector<4x8xf32> to vector<1x4x8xf32>
    %20 = vector.broadcast %19 : vector<1x4x8xf32> to vector<2x4x8xf32>
    %21 = vector.broadcast %17 : vector<2x1x8xf32> to vector<2x4x8xf32>
    %22 = arith.mulf %20, %21 : vector<2x4x8xf32>
    %cst_11 = arith.constant dense<0.000000e+00> : vector<2x4xf32>
    %23 = vector.multi_reduction <add>, %22, %cst_11 [2] : vector<2x4x8xf32> to vector<2x4xf32>
    %24 = vector.shape_cast %23 : vector<2x4xf32> to vector<2x4x1xf32>
    %c0_12 = arith.constant 0 : index
    %c0_13 = arith.constant 0 : index
    %25 = vector.load %arg5[%c0_12, %c0_13] : memref<4x1xf32, #tpu.memory_space<vmem>>, vector<4x1xf32>
    %26 = vector.shape_cast %25 : vector<4x1xf32> to vector<1x4x1xf32>
    %27 = vector.broadcast %26 : vector<1x4x1xf32> to vector<2x4x1xf32>
    %28 = arith.addf %24, %27 : vector<2x4x1xf32>
    %cst_14 = arith.constant 3.000000e+00 : f32
    %29 = vector.broadcast %cst_14 : f32 to vector<2x4x1xf32>
    %30 = arith.addf %28, %29 : vector<2x4x1xf32>
    %cst_15 = arith.constant 0.000000e+00 : f32
    %cst_16 = arith.constant 6.000000e+00 : f32
    %31 = vector.broadcast %cst_15 : f32 to vector<2x4x1xf32>
    %32 = arith.maximumf %31, %30 : vector<2x4x1xf32>
    %33 = vector.broadcast %cst_16 : f32 to vector<2x4x1xf32>
    %34 = arith.minimumf %33, %32 : vector<2x4x1xf32>
    %cst_17 = arith.constant 0.166666672 : f32
    %35 = vector.broadcast %cst_17 : f32 to vector<2x4x1xf32>
    %36 = arith.mulf %34, %35 : vector<2x4x1xf32>
    %37 = vector.broadcast %36 : vector<2x4x1xf32> to vector<2x4x256xf32>
    %38 = arith.mulf %0, %37 : vector<2x4x256xf32>
    %c0_18 = arith.constant 0 : index
    %c0_19 = arith.constant 0 : index
    %c0_20 = arith.constant 0 : index
    %39 = vector.load %arg6[%c0_18, %c0_19, %c0_20] : memref<2x4x256xf32, #tpu.memory_space<vmem>>, vector<2x4x256xf32>
    tpu.vector_store %arg6[%c0_18, %c0_19, %c0_20], %38 {strides = array<i32>} : memref<2x4x256xf32, #tpu.memory_space<vmem>>, vector<2x4x256xf32>,
    return
  }
  func.func @transform_0(%arg0: i32) -> (i32, i32, i32) {
    %c0_i32 = arith.constant 0 : i32
    %c0_i32_0 = arith.constant 0 : i32
    %c0_i32_1 = arith.constant 0 : i32
    return %arg0, %c0_i32, %c0_i32_0 : i32, i32, i32
  }
  func.func @transform_1(%arg0: i32) -> (i32, i32) {
    %c0_i32 = arith.constant 0 : i32
    %c0_i32_0 = arith.constant 0 : i32
    %c0_i32_1 = arith.constant 0 : i32
    return %c0_i32, %c0_i32_0 : i32, i32
  }
  func.func @transform_2(%arg0: i32) -> (i32, i32) {
    %c0_i32 = arith.constant 0 : i32
    %c0_i32_0 = arith.constant 0 : i32
    %c0_i32_1 = arith.constant 0 : i32
    return %c0_i32, %c0_i32_0 : i32, i32
  }
  func.func @transform_3(%arg0: i32) -> (i32, i32) {
    %c0_i32 = arith.constant 0 : i32
    %c0_i32_0 = arith.constant 0 : i32
    %c0_i32_1 = arith.constant 0 : i32
    return %c0_i32, %c0_i32_0 : i32, i32
  }
  func.func @transform_4(%arg0: i32) -> (i32, i32) {
    %c0_i32 = arith.constant 0 : i32
    %c0_i32_0 = arith.constant 0 : i32
    %c0_i32_1 = arith.constant 0 : i32
    return %c0_i32, %c0_i32_0 : i32, i32
  }
  func.func @transform_5(%arg0: i32) -> (i32, i32, i32) {
    %c0_i32 = arith.constant 0 : i32
    %c0_i32_0 = arith.constant 0 : i32
    %c0_i32_1 = arith.constant 0 : i32
    return %arg0, %c0_i32, %c0_i32_0 : i32, i32, i32
  }
}

</mosaic_0001>

<llo_original>
// kernel: tpu_custom_call.1
$region0: #{tpu_custom_call.1}
  #allocation0 [shape = 'u32[]', space=smem, size = 0x4, offset = 0x4, fixed_abs, tag = 'smem constant byte address 0x4 - core index']
  #allocation1 [shape = 'u32[72,128]{1,0:T(1,128)}', space=vmem, size = 0x9000, scoped, tag = 'internal scratch']
  %s0 = inlined_call_operand.hbm [shape: f32[2,4,256], index: 0, kind: input, shape index: {}]
  %s1 = inlined_call_operand.vmem [shape: f32[4,8], index: 1, kind: input, shape index: {}]
  %s2 = inlined_call_operand.vmem [shape: f32[1,8], index: 2, kind: input, shape index: {}]
  %s3 = inlined_call_operand.hbm [shape: f32[4,8], index: 3, kind: input, shape index: {}]
  %s4 = inlined_call_operand.vmem [shape: f32[4,1], index: 4, kind: input, shape index: {}]
  %s5 = inlined_call_operand.hbm [shape: f32[2,4,256], index: 5, kind: output, shape index: {}]
  %s6 = sld [smem:[#allocation0]]
  $region38: #{tpu_custom_call.1} parent=0
    _
  %s8 = ssub.s32 1, %s6
  %s9 = scalar_select 0, %s8, %s6
  $region1: #{tpu_custom_call.1} parent=0
    #allocation2 [shape = 'u8[8192]{0}', space=vmem, size = 0x2000, scoped, tag = 'input window, operand 0, single buffered']
    #allocation3 [shape = 's32[1]{0}', space=sflag, size = 0x4, scoped, tag = 'scoped memory for tpu_custom_call.1']
    #allocation4 [shape = 's32[1]{0}', space=sflag, size = 0x4, scoped, tag = 'scoped memory for tpu_custom_call.1']
    #allocation5 [shape = 'u8[2048]{0}', space=vmem, size = 0x800, scoped, tag = 'input window, operand 3, single buffered']
    #allocation6 [shape = 's32[1]{0}', space=sflag, size = 0x4, scoped, tag = 'scoped memory for tpu_custom_call.1']
    #allocation7 [shape = 'u8[8192]{0}', space=vmem, size = 0x2000, scoped, tag = 'output window, operand 0, single buffered']
    %10 = vsyncpa [#allocation3], 0
    %11 = vsyncpa [#allocation6], 0
    %12 = vsyncpa [#allocation4], 0
    // Predicated region
    $region2: #{tpu_custom_call.1} parent=1 // pred_check
      _
    $region3: #{tpu_custom_call.1} parent=1 // pred_check_branch
      %14 = sbr.rel (0) target = $region5
    $region4: #{tpu_custom_call.1} parent=1 // pred_region
      %16 = vsyncadd [#allocation3], 0
      %s17 = sshll.u32 %s0, 4
      %s18 = int_to_ptr.hbm [resolvable:$true] %s17
      %s19 = sshll.u32 [#allocation2], 4
      %s20 = int_to_ptr.vmem [resolvable:$true] %s19
      %25 = dma.hbm_to_vmem [thread:$0]  %s18, 256, %s20, [#allocation3], 128, 128, 8
    $region5: #{tpu_custom_call.1} parent=1 // pred_fallthru
      _
    // Predicated region
    $region6: #{tpu_custom_call.1} parent=1 // pred_check
      _
    $region7: #{tpu_custom_call.1} parent=1 // pred_check_branch
      %27 = sbr.rel (0) target = $region9
    $region8: #{tpu_custom_call.1} parent=1 // pred_region
      _
    $region9: #{tpu_custom_call.1} parent=1 // pred_fallthru
      _
    // Predicated region
    $region10: #{tpu_custom_call.1} parent=1 // pred_check
      _
    $region11: #{tpu_custom_call.1} parent=1 // pred_check_branch
      %29 = sbr.rel (0) target = $region13
    $region12: #{tpu_custom_call.1} parent=1 // pred_region
      _
    $region13: #{tpu_custom_call.1} parent=1 // pred_fallthru
      _
    // Predicated region
    $region14: #{tpu_custom_call.1} parent=1 // pred_check
      _
    $region15: #{tpu_custom_call.1} parent=1 // pred_check_branch
      %31 = sbr.rel (0) target = $region17
    $region16: #{tpu_custom_call.1} parent=1 // pred_region
      %33 = vsyncadd [#allocation6], 0
      %s35 = sshll.u32 %s3, 4
      %s36 = int_to_ptr.hbm [resolvable:$true] %s35
      %s37 = sshll.u32 [#allocation5], 4
      %s38 = int_to_ptr.vmem [resolvable:$true] %s37
      %40 = dma.hbm_to_vmem [thread:$0]  %s36, 64, %s38, [#allocation6]
    $region17: #{tpu_custom_call.1} parent=1 // pred_fallthru
      _
    // Predicated region
    $region18: #{tpu_custom_call.1} parent=1 // pred_check
      _
    $region19: #{tpu_custom_call.1} parent=1 // pred_check_branch
      %42 = sbr.rel (0) target = $region21
    $region20: #{tpu_custom_call.1} parent=1 // pred_region
      _
    $region21: #{tpu_custom_call.1} parent=1 // pred_fallthru
      _
    // Predicated region
    $region22: #{tpu_custom_call.1} parent=1 // pred_check
      _
    $region23: #{tpu_custom_call.1} parent=1 // pred_check_branch
      %44 = sbr.rel (0) target = $region25
    $region24: #{tpu_custom_call.1} parent=1 // pred_region
      %46 = dma.done [#allocation3], 256
    $region25: #{tpu_custom_call.1} parent=1 // pred_fallthru
      _
    // Predicated region
    $region26: #{tpu_custom_call.1} parent=1 // pred_check
      _
    $region27: #{tpu_custom_call.1} parent=1 // pred_check_branch
      %48 = sbr.rel (0) target = $region29
    $region28: #{tpu_custom_call.1} parent=1 // pred_region
      %50 = dma.done [#allocation6], 64
    $region29: #{tpu_custom_call.1} parent=1 // pred_fallthru
      _
    %v51 = vld [vmem:[#allocation2] sm:$0xff]
    %v52 = vld [vmem:[#allocation2 + $0x8] sm:$0xff]
    %55 = vst [vmem:[#allocation1] ss:$2 sm:$0xff] %v51
    %v56 = vld.sshfl [vmem:[#allocation1] sm:$0xff pattern:$0x75316420]
    %v57 = vld.sshfl [vmem:[#allocation1 + $0x8] sm:$0xff pattern:$0x75316420]
    %s58 = scalar_lea.vmem [#allocation1], 16
    %59 = vst [vmem:[%s58] ss:$2 sm:$0xff] %v52
    %v60 = vld.sshfl [vmem:[#allocation1 + $0x10] sm:$0xff pattern:$0x75316420]
    %v61 = vld.sshfl [vmem:[#allocation1 + $0x18] sm:$0xff pattern:$0x75316420]
    %vm66 = vcmask 1043456
    %v67 = vsel %vm66, %v56, 0.0
    %v68 = vsel %vm66, %v57, 0.0
    %v69 = vadd.f32 %v67, %v68
    %70 = vadd.xlane.f32.xlu0 %v69
    %v71 = vpop.xlane.xlu0 %70
    %v72 = vsel %vm66, %v60, 0.0
    %v73 = vsel %vm66, %v61, 0.0
    %v74 = vadd.f32 %v72, %v73
    %75 = vadd.xlane.f32.xlu0 %v74
    %v76 = vpop.xlane.xlu0 %75
    %v77 = vmul.f32 %v71, 0.00390625
    %v78 = vmul.f32 %v76, 0.00390625
    %v79 = vld [vmem:[%s1] sm:$0xf]
    %v80 = vmul.f32 %v79, %v77
    %v81 = vmul.f32 %v79, %v78
    %vm82 = vcmask 60416
    %v83 = vsel %vm82, %v80, 0.0
    %v84 = vrot.slane %v83, 4
    %v85 = vadd.f32 %v83, %v84
    %v86 = vrot.slane %v85, 2
    %v87 = vadd.f32 %v85, %v86
    %v88 = vrot.slane %v87, 1
    %v89 = vadd.f32 %v87, %v88
    %v90 = vsel %vm82, %v81, 0.0
    %v91 = vrot.slane %v90, 4
    %v92 = vadd.f32 %v90, %v91
    %v93 = vrot.slane %v92, 2
    %v94 = vadd.f32 %v92, %v93
    %v95 = vrot.slane %v94, 1
    %v96 = vadd.f32 %v94, %v95
    %v97 = vld [vmem:[%s2] sm:$0x1]
    %v98 = vadd.f32 %v89, %v97
    %v99 = vadd.f32 %v96, %v97
    %v100 = vmax.f32 %v98, 0.0
    %v101 = vmax.f32 %v99, 0.0
    %v102 = vld [vmem:[#allocation5] sm:$0xf]
    %v103 = vperm.slane %v100, 0
    %v104 = vperm.slane %v101, 0
    %v105 = vmul.f32 %v102, %v103
    %v106 = vmul.f32 %v102, %v104
    %v107 = vsel %vm82, %v105, 0.0
    %108 = vadd.xlane.f32.xlu0 %v107
    %v109 = vpop.xlane.xlu0 %108
    %v110 = vsel %vm82, %v106, 0.0
    %111 = vadd.xlane.f32.xlu0 %v110
    %v112 = vpop.xlane.xlu0 %111
    %v113 = vld [vmem:[%s4] sm:$0xf]
    %v114 = vadd.f32 %v109, %v113
    %v115 = vadd.f32 %v112, %v113
    %v116 = vadd.f32 %v114, 3.0
    %v117 = vadd.f32 %v115, 3.0
    %v118 = vmax.f32 %v116, 0.0
    %v119 = vmax.f32 %v117, 0.0
    %v120 = vmin.f32 %v118, 6.0
    %v121 = vmin.f32 %v119, 6.0
    %v122 = vmul.f32 %v120, 0.16666667
    %v123 = vmul.f32 %v121, 0.16666667
    %125 = vset.pattern.permute.xlu0 0
    %126 = vperm.xlu0 %125, %v122
    %v127 = vpop.permute.xlu0 %126
    %129 = vset.pattern.permute.xlu0 0
    %130 = vperm.xlu0 %129, %v123
    %v131 = vpop.permute.xlu0 %130
    %v133 = vunpack.c.l.s4 839922192
    %v134 = vunpack.c.0.s8 %v133
    %v135 = vperm.slane %v127, %v134
    %v137 = vunpack.c.l.s4 839922192
    %v138 = vunpack.c.0.s8 %v137
    %v139 = vperm.slane %v131, %v138
    %v142 = vmul.f32 %v51, %v135
    %v143 = vmul.f32 %v52, %v139
    %144 = vst [vmem:[#allocation7] sm:$0xff] %v142
    %145 = vst [vmem:[#allocation7 + $0x8] sm:$0xff] %v143
    // Predicated region
    $region30: #{tpu_custom_call.1} parent=1 // pred_check
      _
    $region31: #{tpu_custom_call.1} parent=1 // pred_check_branch
      %147 = sbr.rel (0) target = $region33
    $region32: #{tpu_custom_call.1} parent=1 // pred_region
      %149 = vsyncadd [#allocation4], 0
      %s150 = sshll.u32 [#allocation7], 4
      %s151 = int_to_ptr.vmem [resolvable:$true] %s150
      %s152 = sshll.u32 %s5, 4
      %s153 = int_to_ptr.hbm [resolvable:$true] %s152
      %158 = dma.vmem_to_hbm [thread:$0]  %s151, 256, %s153, [#allocation4], 128, 128, 8
    $region33: #{tpu_custom_call.1} parent=1 // pred_fallthru
      _
    // Predicated region
    $region34: #{tpu_custom_call.1} parent=1 // pred_check
      _
    $region35: #{tpu_custom_call.1} parent=1 // pred_check_branch
      %160 = sbr.rel (0) target = $region37
    $region36: #{tpu_custom_call.1} parent=1 // pred_region
      %162 = dma.done [#allocation4], 256
    $region37: #{tpu_custom_call.1} parent=1 // pred_fallthru
      _
    %163 = vsyncpa [#allocation3], 1
    %164 = vsyncpa [#allocation6], 1
    %165 = vsyncpa [#allocation4], 1

</llo_original>
